<compile_context>
chip_gen: v7x
topology: tpu7x:2x2x1
jax: 0.10.0
libtpu: 0.0.40
codegen_flags: <defaults>
</compile_context>

<pallas_src>
import jax
import jax.numpy as jnp
import numpy as np
from jax.experimental import pallas as pl
from jax.experimental.pallas import tpu as pltpu


def _point_attention_kernel(f1_ref, f2_ref, w1_ref, b1_ref, w2d_ref, b2d_ref,
                            out_ref):
    """Refs (one (batch, N-tile) per grid step):
       f1, f2, out : (1, C, TN)     NCL layout, lane-dense on TN
       w1          : (2Cr, C)       fused first-layer weights  [branch a ; branch b]
       b1          : (2Cr, 1)       fused first-layer bias (BN folded)
       w2d         : (1, 2Cr)       [w2a ; -w2b]  (logit difference weights)
       b2d         : (1,) in SMEM   scalar  b2a - b2b
    """
    f1 = f1_ref[0].astype(jnp.float32)          # (C, TN)
    f2 = f2_ref[0].astype(jnp.float32)          # (C, TN)
    u = f1 + f2                                 # feature_U

    # Fused branch-a/branch-b first layer: Conv1d(C->Cr,1)+BN+ReLU  (BN folded)
    h = jnp.maximum(
        jnp.dot(w1_ref[...], u, preferred_element_type=jnp.float32)
        + b1_ref[...],
        0.0)                                    # (2Cr, TN)

    # logit_a - logit_b in one dot, bias folded to a single SMEM scalar.
    delta = (jnp.dot(w2d_ref[...], h, preferred_element_type=jnp.float32)
             + b2d_ref[0])                      # (1, TN)

    # softmax over 2 branches == sigmoid of the logit difference.
    wa = jax.nn.sigmoid(delta)                  # (1, TN)
    wb = 1.0 - wa

    out_ref[0] = (wa * f1 + wb * f2).astype(out_ref.dtype)


def point_attention_pallas(f1, f2, fused):
    """f1, f2: (B, C, N) in PyTorch NCL layout.  Returns (B, C, N)."""
    B, C, N = f1.shape
    two_cr = fused["w1"].shape[0]

    # Lane-dense N tile (multiple of 128) to bound per-step VMEM on v7x while
    # keeping blocks big enough to amortize per-grid-step overhead.
    TN = N
    for cand in (2048, 1024, 512, 256, 128):
        if N % cand == 0:
            TN = cand
            break

    feat_spec = pl.BlockSpec((1, C, TN), lambda b, n: (b, 0, n))
    w1_spec = pl.BlockSpec((two_cr, C), lambda b, n: (0, 0))
    b1_spec = pl.BlockSpec((two_cr, 1), lambda b, n: (0, 0))
    w2d_spec = pl.BlockSpec((1, two_cr), lambda b, n: (0, 0))
    b2d_spec = pl.BlockSpec(memory_space=pltpu.MemorySpace.SMEM)

    grid_spec = pltpu.PrefetchScalarGridSpec(
        num_scalar_prefetch=0,
        grid=(B, N // TN),
        in_specs=[feat_spec, feat_spec, w1_spec, b1_spec, w2d_spec, b2d_spec],
        out_specs=feat_spec,
    )

    return pl.pallas_call(
        _point_attention_kernel,
        out_shape=jax.ShapeDtypeStruct((B, C, N), f1.dtype),
        grid_spec=grid_spec,
        compiler_params=pltpu.CompilerParams(
            dimension_semantics=("parallel", "parallel")),
    )(f1, f2, fused["w1"], fused["b1"], fused["w2d"], fused["b2d"])


def _fold_branch(key, C, Cr, eps=1e-5):
    """Make Conv1d+BN+ReLU+Conv1d+BN params (deterministic) and fold BN (eval)
    into effective (W1, b1, w2, b2) such that, per point x (a C-vector):
        h = relu(W1 @ x + b1) ; logit = w2 @ h + b2
    Shapes: W1 (Cr, C), b1 (Cr,), w2 (Cr,), b2 scalar.
    """
    ks = jax.random.split(key, 10)
    conv1_w = jax.random.normal(ks[0], (Cr, C), jnp.float32) * 0.2
    conv1_b = jax.random.normal(ks[1], (Cr,), jnp.float32) * 0.1
    bn1_g = 1.0 + 0.1 * jax.random.normal(ks[2], (Cr,), jnp.float32)
    bn1_b = 0.1 * jax.random.normal(ks[3], (Cr,), jnp.float32)
    bn1_m = 0.1 * jax.random.normal(ks[4], (Cr,), jnp.float32)
    bn1_v = 1.0 + 0.1 * jax.random.uniform(ks[5], (Cr,), jnp.float32)
    conv2_w = jax.random.normal(ks[6], (Cr,), jnp.float32) * 0.2
    conv2_b = jax.random.normal(ks[7], (), jnp.float32) * 0.1
    bn2_g = 1.0 + 0.1 * jax.random.normal(ks[8], (), jnp.float32)
    bn2_b = 0.1 * jax.random.normal(ks[9], (), jnp.float32)
    bn2_m = jnp.zeros((), jnp.float32)
    bn2_v = jnp.ones((), jnp.float32)

    s1 = bn1_g / jnp.sqrt(bn1_v + eps)
    W1 = conv1_w * s1[:, None]
    b1 = (conv1_b - bn1_m) * s1 + bn1_b
    s2 = bn2_g / jnp.sqrt(bn2_v + eps)
    w2 = conv2_w * s2
    b2 = (conv2_b - bn2_m) * s2 + bn2_b
    return W1, b1, w2, b2


def _fuse_params(p, Cr):
    """Pack the two folded branches into the fused kernel operands."""
    return dict(
        w1=jnp.concatenate([p["w1a"], p["w1b"]], axis=0),             # (2Cr, C)
        b1=jnp.concatenate([p["b1a"], p["b1b"]]).reshape(2 * Cr, 1),  # (2Cr, 1)
        w2d=jnp.concatenate([p["w2a"], -p["w2b"]]).reshape(1, 2 * Cr),  # (1, 2Cr)
        b2d=jnp.reshape(p["b2a"] - p["b2b"], (1,)),                   # (1,)
    )


def _reference(f1, f2, p):
    """Pure-JAX reference in NCL layout, using the un-fused folded params and
    the original 2-way softmax (independent check of the fusion + sigmoid)."""
    u = (f1 + f2).astype(jnp.float32)                                  # (B, C, N)

    def branch(w1, b1, w2, b2):
        h = jax.nn.relu(jnp.einsum('rc,bcn->brn', w1, u) + b1[None, :, None])
        return jnp.einsum('r,brn->bn', w2, h) + b2                     # (B, N)

    la = branch(p["w1a"], p["b1a"], p["w2a"], p["b2a"])
    lb = branch(p["w1b"], p["b1b"], p["w2b"], p["b2b"])
    w = jax.nn.softmax(jnp.stack([la, lb], axis=1), axis=1)            # (B, 2, N)
    return w[:, 0:1, :] * f1 + w[:, 1:2, :] * f2


if __name__ == "__main__":
    B, C, N = 2, 16, 128        # channel=16, reduction=4 -> Cr=4; N=128 points
    Cr = C // 4

    key = jax.random.PRNGKey(0)
    k1, k2, kA, kB = jax.random.split(key, 4)

    # Inputs already in PyTorch layout (B, C, N); no transposes needed.
    feature1 = jax.random.normal(k1, (B, C, N), jnp.float32)
    feature2 = jax.random.normal(k2, (B, C, N), jnp.float32)

    w1a, b1a, w2a, b2a = _fold_branch(kA, C, Cr)
    w1b, b1b, w2b, b2b = _fold_branch(kB, C, Cr)
    params = dict(w1a=w1a, b1a=b1a, w2a=w2a, b2a=b2a,
                  w1b=w1b, b1b=b1b, w2b=w2b, b2b=b2b)
    fused = _fuse_params(params, Cr)

    out = point_attention_pallas(feature1, feature2, fused)
    out = jax.block_until_ready(out)

    ref = jax.block_until_ready(_reference(feature1, feature2, params))
    assert np.allclose(np.asarray(out), np.asarray(ref), rtol=1e-5, atol=1e-5), \
        "Pallas kernel diverges from reference"

    print("KERNEL_OK")
</pallas_src>

<mosaic_0001>
module attributes {stable_mosaic.version = 11 : i64} {
  func.func @_point_attention_kernel(%arg0: i32, %arg1: i32, %arg2: memref<1x16x128xf32, #tpu.memory_space<vmem>>, %arg3: memref<1x16x128xf32, #tpu.memory_space<vmem>>, %arg4: memref<8x16xf32, #tpu.memory_space<vmem>>, %arg5: memref<8x1xf32, #tpu.memory_space<vmem>>, %arg6: memref<1x8xf32, #tpu.memory_space<vmem>>, %arg7: memref<1xf32, #tpu.memory_space<smem>>, %arg8: memref<1x16x128xf32, #tpu.memory_space<vmem>>) attributes {dimension_semantics = [#tpu.dimension_semantics<parallel>, #tpu.dimension_semantics<parallel>], iteration_bounds = array<i64: 2, 1>, scalar_prefetch = 0 : i64, scratch_operands = 0 : i64, tpu.core_type = #tpu.core_type<tc>, window_params = [{transform_indices = @transform_0, window_bounds = array<i64: 1, 16, 128>}, {transform_indices = @transform_1, window_bounds = array<i64: 1, 16, 128>}, {pipeline_mode = #tpu.pipeline_mode<synchronous>, transform_indices = @transform_2, window_bounds = array<i64: 8, 16>}, {pipeline_mode = #tpu.pipeline_mode<synchronous>, transform_indices = @transform_3, window_bounds = array<i64: 8, 1>}, {pipeline_mode = #tpu.pipeline_mode<synchronous>, transform_indices = @transform_4, window_bounds = array<i64: 1, 8>}, {transform_indices = @transform_5, window_bounds = array<i64: 1>}, {transform_indices = @transform_6, window_bounds = array<i64: 1, 16, 128>}]} {
    %c0 = arith.constant 0 : index
    %c0_0 = arith.constant 0 : index
    %c0_1 = arith.constant 0 : index
    %0 = vector.load %arg2[%c0, %c0_0, %c0_1] : memref<1x16x128xf32, #tpu.memory_space<vmem>>, vector<1x16x128xf32>
    %1 = vector.shape_cast %0 : vector<1x16x128xf32> to vector<16x128xf32>
    %c0_2 = arith.constant 0 : index
    %c0_3 = arith.constant 0 : index
    %c0_4 = arith.constant 0 : index
    %2 = vector.load %arg3[%c0_2, %c0_3, %c0_4] : memref<1x16x128xf32, #tpu.memory_space<vmem>>, vector<1x16x128xf32>
    %3 = vector.shape_cast %2 : vector<1x16x128xf32> to vector<16x128xf32>
    %4 = arith.addf %1, %3 : vector<16x128xf32>
    %c0_5 = arith.constant 0 : index
    %c0_6 = arith.constant 0 : index
    %5 = vector.load %arg4[%c0_5, %c0_6] : memref<8x16xf32, #tpu.memory_space<vmem>>, vector<8x16xf32>
    %cst = arith.constant dense<0.000000e+00> : vector<8x128xf32>
    %6 = tpu.matmul %5, %4, %cst {dimension_numbers = #tpu.dot_dimension_numbers<[1], [0], [0], [1], [0, 0, 1, 1], [], []>} : vector<8x16xf32>, vector<16x128xf32>, vector<8x128xf32> -> vector<8x128xf32>
    %c0_7 = arith.constant 0 : index
    %c0_8 = arith.constant 0 : index
    %7 = vector.load %arg5[%c0_7, %c0_8] : memref<8x1xf32, #tpu.memory_space<vmem>>, vector<8x1xf32>
    %8 = vector.broadcast %7 : vector<8x1xf32> to vector<8x128xf32>
    %9 = arith.addf %6, %8 : vector<8x128xf32>
    %cst_9 = arith.constant 0.000000e+00 : f32
    %10 = vector.broadcast %cst_9 : f32 to vector<8x128xf32>
    %11 = arith.maximumf %9, %10 : vector<8x128xf32>
    %c0_10 = arith.constant 0 : index
    %c0_11 = arith.constant 0 : index
    %12 = vector.load %arg6[%c0_10, %c0_11] : memref<1x8xf32, #tpu.memory_space<vmem>>, vector<1x8xf32>
    %cst_12 = arith.constant dense<0.000000e+00> : vector<1x128xf32>
    %13 = tpu.matmul %12, %11, %cst_12 {dimension_numbers = #tpu.dot_dimension_numbers<[1], [0], [0], [1], [0, 0, 1, 1], [], []>} : vector<1x8xf32>, vector<8x128xf32>, vector<1x128xf32> -> vector<1x128xf32>
    %c0_13 = arith.constant 0 : index
    %14 = memref.load %arg7[%c0_13] : memref<1xf32, #tpu.memory_space<smem>>
    %15 = vector.broadcast %14 : f32 to vector<1x128xf32>
    %16 = arith.addf %13, %15 : vector<1x128xf32>
    %17 = arith.negf %16 : vector<1x128xf32>
    %18 = math.exp %17 : vector<1x128xf32>
    %cst_14 = arith.constant 1.000000e+00 : f32
    %19 = vector.broadcast %cst_14 : f32 to vector<1x128xf32>
    %20 = arith.addf %19, %18 : vector<1x128xf32>
    %21 = arith.divf %19, %20 : vector<1x128xf32>
    %cst_15 = arith.constant 1.000000e+00 : f32
    %22 = vector.broadcast %cst_15 : f32 to vector<1x128xf32>
    %23 = arith.subf %22, %21 : vector<1x128xf32>
    %24 = vector.broadcast %21 : vector<1x128xf32> to vector<16x128xf32>
    %25 = arith.mulf %24, %1 : vector<16x128xf32>
    %26 = vector.broadcast %23 : vector<1x128xf32> to vector<16x128xf32>
    %27 = arith.mulf %26, %3 : vector<16x128xf32>
    %28 = arith.addf %25, %27 : vector<16x128xf32>
    %c0_16 = arith.constant 0 : index
    %c0_17 = arith.constant 0 : index
    %c0_18 = arith.constant 0 : index
    %29 = vector.load %arg8[%c0_16, %c0_17, %c0_18] : memref<1x16x128xf32, #tpu.memory_space<vmem>>, vector<1x16x128xf32>
    %30 = vector.shape_cast %29 : vector<1x16x128xf32> to vector<16x128xf32>
    %31 = vector.shape_cast %28 : vector<16x128xf32> to vector<1x16x128xf32>
    tpu.vector_store %arg8[%c0_16, %c0_17, %c0_18], %31 {strides = array<i32>} : memref<1x16x128xf32, #tpu.memory_space<vmem>>, vector<1x16x128xf32>,
    return
  }
  func.func @transform_0(%arg0: i32, %arg1: i32) -> (i32, i32, i32) {
    %c0_i32 = arith.constant 0 : i32
    %c0_i32_0 = arith.constant 0 : i32
    return %arg0, %c0_i32, %arg1 : i32, i32, i32
  }
  func.func @transform_1(%arg0: i32, %arg1: i32) -> (i32, i32, i32) {
    %c0_i32 = arith.constant 0 : i32
    %c0_i32_0 = arith.constant 0 : i32
    return %arg0, %c0_i32, %arg1 : i32, i32, i32
  }
  func.func @transform_2(%arg0: i32, %arg1: i32) -> (i32, i32) {
    %c0_i32 = arith.constant 0 : i32
    %c0_i32_0 = arith.constant 0 : i32
    %c0_i32_1 = arith.constant 0 : i32
    return %c0_i32, %c0_i32_0 : i32, i32
  }
  func.func @transform_3(%arg0: i32, %arg1: i32) -> (i32, i32) {
    %c0_i32 = arith.constant 0 : i32
    %c0_i32_0 = arith.constant 0 : i32
    %c0_i32_1 = arith.constant 0 : i32
    return %c0_i32, %c0_i32_0 : i32, i32
  }
  func.func @transform_4(%arg0: i32, %arg1: i32) -> (i32, i32) {
    %c0_i32 = arith.constant 0 : i32
    %c0_i32_0 = arith.constant 0 : i32
    %c0_i32_1 = arith.constant 0 : i32
    return %c0_i32, %c0_i32_0 : i32, i32
  }
  func.func @transform_5(%arg0: i32, %arg1: i32) -> i32 {
    %c0_i32 = arith.constant 0 : i32
    %c0_i32_0 = arith.constant 0 : i32
    return %c0_i32 : i32
  }
  func.func @transform_6(%arg0: i32, %arg1: i32) -> (i32, i32, i32) {
    %c0_i32 = arith.constant 0 : i32
    %c0_i32_0 = arith.constant 0 : i32
    return %arg0, %c0_i32, %arg1 : i32, i32, i32
  }
}

</mosaic_0001>

<llo_original>
// kernel: tpu_custom_call.1
$region0: #{tpu_custom_call.1}
  #allocation0 [shape = 'u32[]', space=smem, size = 0x4, offset = 0x4, fixed_abs, tag = 'smem constant byte address 0x4 - core index']
  #allocation1 [shape = 'u32[144,128]{1,0:T(1,128)}', space=vmem, size = 0x12000, scoped, tag = 'internal scratch']
  #allocation2 [shape = 'f32[1]{0:T(128)S(6)}', space=smem, size = 0x200, scoped, tag = 'scoped memory for tpu_custom_call.1']
  %s0 = inlined_call_operand.hbm [shape: f32[2,16,128], index: 0, kind: input, shape index: {}]
  %s1 = inlined_call_operand.hbm [shape: f32[2,16,128], index: 1, kind: input, shape index: {}]
  %s2 = inlined_call_operand.vmem [shape: f32[8,16], index: 2, kind: input, shape index: {}]
  %s3 = inlined_call_operand.vmem [shape: f32[8,1], index: 3, kind: input, shape index: {}]
  %s4 = inlined_call_operand.vmem [shape: f32[1,8], index: 4, kind: input, shape index: {}]
  %s5 = inlined_call_operand.<no memory space> [shape: f32[1], index: 5, kind: input, shape index: {}]
  %s6 = inlined_call_operand.hbm [shape: f32[2,16,128], index: 6, kind: output, shape index: {}]
  %s7 = sld [smem:[#allocation0]]
  $region65: #{tpu_custom_call.1} parent=0
    _
  %s9 = ssub.s32 1, %s7
  %s10 = scalar_select 0, %s9, %s7
  %11 = sst [smem:[#allocation2]] %s5
  $region1: #{tpu_custom_call.1} parent=0
    #allocation3 [shape = 'u8[16384]{0}', space=vmem, size = 0x4000, scoped, tag = 'input window, operand 0']
    #allocation4 [shape = 's32[2]{0}', space=sflag, size = 0x8, scoped, tag = 'scoped memory for tpu_custom_call.1']
    #allocation5 [shape = 's32[2]{0}', space=sflag, size = 0x8, scoped, tag = 'scoped memory for tpu_custom_call.1']
    #allocation6 [shape = 'u8[16384]{0}', space=vmem, size = 0x4000, scoped, tag = 'input window, operand 1']
    #allocation7 [shape = 's32[2]{0}', space=sflag, size = 0x8, scoped, tag = 'scoped memory for tpu_custom_call.1']
    #allocation8 [shape = 'u8[16384]{0}', space=vmem, size = 0x4000, scoped, tag = 'output window, operand 0']
    %12 = vsyncpa [#allocation4], 0
    %s13 = scalar_lea.sflag [#allocation4], 1
    %14 = vsyncpa %s13, 0
    %15 = vsyncpa [#allocation7], 0
    %s16 = scalar_lea.sflag [#allocation7], 1
    %17 = vsyncpa %s16, 0
    %18 = vsyncpa [#allocation5], 0
    %s19 = scalar_lea.sflag [#allocation5], 1
    %20 = vsyncpa %s19, 0
    loop: start=0, step=1, limit=4
    $region2: #{tpu_custom_call.1} parent=1 // loop_pre_header
      _
    $region3: #{tpu_custom_call.1} parent=1 // loop_header
      %s22 = sphi 0, %s26
      %p23 = scmp.ge.s32.totalorder %s22, 4
      %s29 = sphi 0, %s41
      %s30 = sphi 0, %s37
      %s31 = sphi 0, %s29
      %s32 = sphi 0, %s30
      %s33 = sphi 0, %s31
      %s34 = sphi 0, %s32
      %s46 = sphi 0, %s48
      %s49 = sphi 0, %s46
      %s50 = sphi 0, %s49
      %s66 = sphi 0, %s50
      %s74 = sphi 0, %s76
      %s77 = sphi 0, %s74
      %s78 = sphi 0, %s77
      %s94 = sphi 0, %s78
      %s98 = sphi 0, %s98
      %s100 = sphi 0, %s98
      %s101 = sphi 0, %s100
      %s115 = sphi 0, %s101
      %s119 = sphi 0, %s119
      %s121 = sphi 0, %s119
      %s122 = sphi 0, %s121
      %s136 = sphi 0, %s122
      %s140 = sphi 0, %s140
      %s142 = sphi 0, %s140
      %s143 = sphi 0, %s142
      %s157 = sphi 0, %s143
      %s161 = sphi 0, %s161
      %s163 = sphi 0, %s161
      %s164 = sphi 0, %s163
      %s178 = sphi 0, %s164
      %s186 = sphi 0, %s188
      %s189 = sphi 0, %s186
      %s190 = sphi 0, %s189
      %s206 = sphi 0, %s190
    $region4: #{tpu_custom_call.1} parent=1 // loop_header_branch
      %25 = sbr.rel (%p23) target = $region8
    $region5: #{tpu_custom_call.1} parent=1 // loop_body
      %s27 = ssub.s32 %s22, 1
      %s28 = ssub.s32 %s22, 2
      %s35 = sadd.s32 1, %s30
      %p36 = scmp.ge.s32.totalorder %s35, 1
      %s37 = scalar_select %p36, 0, %s35
      %s38 = sadd.s32 1, %s29
      %s39 = scalar_select %p36, %s38, %s29
      %p40 = scmp.ge.s32.totalorder %s39, 2
      %s41 = scalar_select %p40, 0, %s39
      %s42 = ssub.s32 %s29, %s41
      %s43 = ssub.s32 %s30, %s37
      %s44 = sor.u32 %s42, %s43
      %p45 = scmp.eq.s32.totalorder %s44, 0
      %s47 = sadd.s32 %s46, 1
      %s48 = scalar_select %p45, %s46, %s47
      %p51 = pneg %p45
      %p52 = scmp.eq.s32.totalorder %s22, 1
      %p53 = por %p51, %p52
      %p54 = scmp.ne.s32.totalorder %s46, %s49
      %p55 = scmp.eq.s32.totalorder %s22, 0
      %p56 = por %p54, %p55
      %p57 = scmp.ne.s32.totalorder %s46, %s49
      %p58 = scmp.eq.s32.totalorder %s27, 1
      %p59 = por %p57, %p58
      %p60 = scmp.ne.s32.totalorder %s49, %s50
      %p61 = scmp.eq.s32.totalorder %s27, 0
      %p62 = por %p60, %p61
      %p63 = scmp.ne.s32.totalorder %s49, %s50
      %p64 = scmp.eq.s32.totalorder %s28, 1
      %p65 = por %p63, %p64
      %p67 = scmp.ne.s32.totalorder %s50, %s66
      %p68 = scmp.eq.s32.totalorder %s28, 0
      %p69 = por %p67, %p68
      %s70 = ssub.s32 %s29, %s41
      %s71 = ssub.s32 %s30, %s37
      %s72 = sor.u32 %s70, %s71
      %p73 = scmp.eq.s32.totalorder %s72, 0
      %s75 = sadd.s32 %s74, 1
      %s76 = scalar_select %p73, %s74, %s75
      %p79 = pneg %p73
      %p80 = scmp.eq.s32.totalorder %s22, 1
      %p81 = por %p79, %p80
      %p82 = scmp.ne.s32.totalorder %s74, %s77
      %p83 = scmp.eq.s32.totalorder %s22, 0
      %p84 = por %p82, %p83
      %p85 = scmp.ne.s32.totalorder %s74, %s77
      %p86 = scmp.eq.s32.totalorder %s27, 1
      %p87 = por %p85, %p86
      %p88 = scmp.ne.s32.totalorder %s77, %s78
      %p89 = scmp.eq.s32.totalorder %s27, 0
      %p90 = por %p88, %p89
      %p91 = scmp.ne.s32.totalorder %s77, %s78
      %p92 = scmp.eq.s32.totalorder %s28, 1
      %p93 = por %p91, %p92
      %p95 = scmp.ne.s32.totalorder %s78, %s94
      %p96 = scmp.eq.s32.totalorder %s28, 0
      %p97 = por %p95, %p96
      %s99 = sadd.s32 %s98, 1
      %p102 = scmp.eq.s32.totalorder %s22, 1
      %p103 = scmp.ne.s32.totalorder %s98, %s100
      %p104 = scmp.eq.s32.totalorder %s22, 0
      %p105 = por %p103, %p104
      %p106 = scmp.ne.s32.totalorder %s98, %s100
      %p107 = scmp.eq.s32.totalorder %s27, 1
      %p108 = por %p106, %p107
      %p109 = scmp.ne.s32.totalorder %s100, %s101
      %p110 = scmp.eq.s32.totalorder %s27, 0
      %p111 = por %p109, %p110
      %p112 = scmp.ne.s32.totalorder %s100, %s101
      %p113 = scmp.eq.s32.totalorder %s28, 1
      %p114 = por %p112, %p113
      %p116 = scmp.ne.s32.totalorder %s101, %s115
      %p117 = scmp.eq.s32.totalorder %s28, 0
      %p118 = por %p116, %p117
      %s120 = sadd.s32 %s119, 1
      %p123 = scmp.eq.s32.totalorder %s22, 1
      %p124 = scmp.ne.s32.totalorder %s119, %s121
      %p125 = scmp.eq.s32.totalorder %s22, 0
      %p126 = por %p124, %p125
      %p127 = scmp.ne.s32.totalorder %s119, %s121
      %p128 = scmp.eq.s32.totalorder %s27, 1
      %p129 = por %p127, %p128
      %p130 = scmp.ne.s32.totalorder %s121, %s122
      %p131 = scmp.eq.s32.totalorder %s27, 0
      %p132 = por %p130, %p131
      %p133 = scmp.ne.s32.totalorder %s121, %s122
      %p134 = scmp.eq.s32.totalorder %s28, 1
      %p135 = por %p133, %p134
      %p137 = scmp.ne.s32.totalorder %s122, %s136
      %p138 = scmp.eq.s32.totalorder %s28, 0
      %p139 = por %p137, %p138
      %s141 = sadd.s32 %s140, 1
      %p144 = scmp.eq.s32.totalorder %s22, 1
      %p145 = scmp.ne.s32.totalorder %s140, %s142
      %p146 = scmp.eq.s32.totalorder %s22, 0
      %p147 = por %p145, %p146
      %p148 = scmp.ne.s32.totalorder %s140, %s142
      %p149 = scmp.eq.s32.totalorder %s27, 1
      %p150 = por %p148, %p149
      %p151 = scmp.ne.s32.totalorder %s142, %s143
      %p152 = scmp.eq.s32.totalorder %s27, 0
      %p153 = por %p151, %p152
      %p154 = scmp.ne.s32.totalorder %s142, %s143
      %p155 = scmp.eq.s32.totalorder %s28, 1
      %p156 = por %p154, %p155
      %p158 = scmp.ne.s32.totalorder %s143, %s157
      %p159 = scmp.eq.s32.totalorder %s28, 0
      %p160 = por %p158, %p159
      %s162 = sadd.s32 %s161, 1
      %p165 = scmp.eq.s32.totalorder %s22, 1
      %p166 = scmp.ne.s32.totalorder %s161, %s163
      %p167 = scmp.eq.s32.totalorder %s22, 0
      %p168 = por %p166, %p167
      %p169 = scmp.ne.s32.totalorder %s161, %s163
      %p170 = scmp.eq.s32.totalorder %s27, 1
      %p171 = por %p169, %p170
      %p172 = scmp.ne.s32.totalorder %s163, %s164
      %p173 = scmp.eq.s32.totalorder %s27, 0
      %p174 = por %p172, %p173
      %p175 = scmp.ne.s32.totalorder %s163, %s164
      %p176 = scmp.eq.s32.totalorder %s28, 1
      %p177 = por %p175, %p176
      %p179 = scmp.ne.s32.totalorder %s164, %s178
      %p180 = scmp.eq.s32.totalorder %s28, 0
      %p181 = por %p179, %p180
      %s182 = ssub.s32 %s29, %s41
      %s183 = ssub.s32 %s30, %s37
      %s184 = sor.u32 %s182, %s183
      %p185 = scmp.eq.s32.totalorder %s184, 0
      %s187 = sadd.s32 %s186, 1
      %s188 = scalar_select %p185, %s186, %s187
      %p191 = pneg %p185
      %p192 = scmp.eq.s32.totalorder %s22, 1
      %p193 = por %p191, %p192
      %p194 = scmp.ne.s32.totalorder %s186, %s189
      %p195 = scmp.eq.s32.totalorder %s22, 0
      %p196 = por %p194, %p195
      %p197 = scmp.ne.s32.totalorder %s186, %s189
      %p198 = scmp.eq.s32.totalorder %s27, 1
      %p199 = por %p197, %p198
      %p200 = scmp.ne.s32.totalorder %s189, %s190
      %p201 = scmp.eq.s32.totalorder %s27, 0
      %p202 = por %p200, %p201
      %p203 = scmp.ne.s32.totalorder %s189, %s190
      %p204 = scmp.eq.s32.totalorder %s28, 1
      %p205 = por %p203, %p204
      %p207 = scmp.ne.s32.totalorder %s190, %s206
      %p208 = scmp.eq.s32.totalorder %s28, 0
      %p209 = por %p207, %p208
      %p210 = scmp.le.s32.totalorder 1, %s22
      %p211 = scmp.lt.s32.totalorder %s22, 3
      %p212 = pnand %p210, %p211
      %p213 = pneg %p212
      // Predicated region
      $region9: #{tpu_custom_call.1} parent=5 // pred_check
        _
      $region10: #{tpu_custom_call.1} parent=5 // pred_check_branch
        %215 = sbr.rel (%p212) target = $region12
      $region11: #{tpu_custom_call.1} parent=5 // pred_region
        %s216 = ssub.s32 %s22, 1
        // Predicated region
        $region13: #{tpu_custom_call.1} parent=11 // pred_check
          %p217 = pneg %p111
        $region14: #{tpu_custom_call.1} parent=11 // pred_check_branch
          %219 = sbr.rel (%p217) target = $region16
        $region15: #{tpu_custom_call.1} parent=11 // pred_region
          _
        $region16: #{tpu_custom_call.1} parent=11 // pred_fallthru
          _
        // Predicated region
        $region17: #{tpu_custom_call.1} parent=11 // pred_check
          %p220 = pneg %p132
        $region18: #{tpu_custom_call.1} parent=11 // pred_check_branch
          %222 = sbr.rel (%p220) target = $region20
        $region19: #{tpu_custom_call.1} parent=11 // pred_region
          _
        $region20: #{tpu_custom_call.1} parent=11 // pred_fallthru
          _
        // Predicated region
        $region21: #{tpu_custom_call.1} parent=11 // pred_check
          %p223 = pneg %p153
        $region22: #{tpu_custom_call.1} parent=11 // pred_check_branch
          %225 = sbr.rel (%p223) target = $region24
        $region23: #{tpu_custom_call.1} parent=11 // pred_region
          _
        $region24: #{tpu_custom_call.1} parent=11 // pred_fallthru
          _
        // Predicated region
        $region25: #{tpu_custom_call.1} parent=11 // pred_check
          %p226 = pneg %p174
        $region26: #{tpu_custom_call.1} parent=11 // pred_check_branch
          %228 = sbr.rel (%p226) target = $region28
        $region27: #{tpu_custom_call.1} parent=11 // pred_region
          _
        $region28: #{tpu_custom_call.1} parent=11 // pred_fallthru
          _
      $region12: #{tpu_custom_call.1} parent=5 // pred_fallthru
        _
      %p229 = scmp.lt.s32.totalorder %s22, 2
      // Predicated region
      $region29: #{tpu_custom_call.1} parent=5 // pred_check
        %p230 = pneg %p229
      $region30: #{tpu_custom_call.1} parent=5 // pred_check_branch
        %232 = sbr.rel (%p230) target = $region32
      $region31: #{tpu_custom_call.1} parent=5 // pred_region
        // Predicated region
        $region33: #{tpu_custom_call.1} parent=31 // pred_check
          %p233 = pneg %p56
        $region34: #{tpu_custom_call.1} parent=31 // pred_check_branch
          %235 = sbr.rel (%p233) target = $region36
        $region35: #{tpu_custom_call.1} parent=31 // pred_region
          %s236 = sand.u32 %s46, 1
          %s237 = scalar_lea.sflag [#allocation4], %s236
          %s238 = sand.u32 %s46, 1
          %s239 = smul.addr %s238, 16
          %s240 = scalar_lea.vmem [#allocation3], %s239
          %s242 = ssub.s32 256, 256
          %243 = vsyncadd %s237, %s242
          %s244 = smul.addr %s29, 2
          %s245 = sadd.s32 %s30, %s244
          %s246 = smul.addr %s245, 128
          %s247 = scalar_lea.hbm %s0, %s246
          %s248 = sshll.u32 %s240, 4
          %s249 = int_to_ptr.vmem [resolvable:$true] %s248
          %254 = dma.hbm_to_vmem [thread:$0]  %s247, 256, %s249, %s237, 128, 128, 8
        $region36: #{tpu_custom_call.1} parent=31 // pred_fallthru
          _
        // Predicated region
        $region37: #{tpu_custom_call.1} parent=31 // pred_check
          %p255 = pneg %p84
        $region38: #{tpu_custom_call.1} parent=31 // pred_check_branch
          %257 = sbr.rel (%p255) target = $region40
        $region39: #{tpu_custom_call.1} parent=31 // pred_region
          %s258 = sand.u32 %s74, 1
          %s259 = scalar_lea.sflag [#allocation7], %s258
          %s260 = sand.u32 %s74, 1
          %s261 = smul.addr %s260, 16
          %s262 = scalar_lea.vmem [#allocation6], %s261
          %s264 = ssub.s32 256, 256
          %265 = vsyncadd %s259, %s264
          %s266 = smul.addr %s29, 2
          %s267 = sadd.s32 %s30, %s266
          %s268 = smul.addr %s267, 128
          %s269 = scalar_lea.hbm %s1, %s268
          %s270 = sshll.u32 %s262, 4
          %s271 = int_to_ptr.vmem [resolvable:$true] %s270
          %276 = dma.hbm_to_vmem [thread:$0]  %s269, 256, %s271, %s259, 128, 128, 8
        $region40: #{tpu_custom_call.1} parent=31 // pred_fallthru
          _
      $region32: #{tpu_custom_call.1} parent=5 // pred_fallthru
        _
      %p277 = scmp.le.s32.totalorder 1, %s22
      %p278 = scmp.lt.s32.totalorder %s22, 3
      %p279 = pnand %p277, %p278
      %p280 = pneg %p279
      // Predicated region
      $region41: #{tpu_custom_call.1} parent=5 // pred_check
        _
      $region42: #{tpu_custom_call.1} parent=5 // pred_check_branch
        %282 = sbr.rel (%p279) target = $region44
      $region43: #{tpu_custom_call.1} parent=5 // pred_region
        %s283 = ssub.s32 %s22, 1
        %s284 = sand.u32 %s49, 1
        %s285 = scalar_lea.sflag [#allocation4], %s284
        %s286 = sand.u32 %s49, 1
        %s287 = smul.addr %s286, 16
        %s288 = scalar_lea.vmem [#allocation3], %s287
        // Predicated region
        $region45: #{tpu_custom_call.1} parent=43 // pred_check
          %p289 = pneg %p62
        $region46: #{tpu_custom_call.1} parent=43 // pred_check_branch
          %291 = sbr.rel (%p289) target = $region48
        $region47: #{tpu_custom_call.1} parent=43 // pred_region
          %292 = dma.done %s285, 256
        $region48: #{tpu_custom_call.1} parent=43 // pred_fallthru
          _
        %s293 = sand.u32 %s77, 1
        %s294 = scalar_lea.sflag [#allocation7], %s293
        %s295 = sand.u32 %s77, 1
        %s296 = smul.addr %s295, 16
        %s297 = scalar_lea.vmem [#allocation6], %s296
        // Predicated region
        $region49: #{tpu_custom_call.1} parent=43 // pred_check
          %p298 = pneg %p90
        $region50: #{tpu_custom_call.1} parent=43 // pred_check_branch
          %300 = sbr.rel (%p298) target = $region52
        $region51: #{tpu_custom_call.1} parent=43 // pred_region
          %301 = dma.done %s294, 256
        $region52: #{tpu_custom_call.1} parent=43 // pred_fallthru
          _
        %s302 = sand.u32 %s49, 1
        %s303 = scalar_lea.sflag [#allocation4], %s302
        %s304 = sand.u32 %s49, 1
        %s305 = smul.addr %s304, 16
        %s306 = scalar_lea.vmem [#allocation3], %s305
        %p307 = pneg %p62
        %p308 = pneg %p59
        %s309 = sand.u32 %s77, 1
        %s310 = scalar_lea.sflag [#allocation7], %s309
        %s311 = sand.u32 %s77, 1
        %s312 = smul.addr %s311, 16
        %s313 = scalar_lea.vmem [#allocation6], %s312
        %p314 = pneg %p90
        %p315 = pneg %p87
        %p316 = pneg %p111
        %p317 = pneg %p108
        %p318 = pneg %p132
        %p319 = pneg %p129
        %p320 = pneg %p153
        %p321 = pneg %p150
        %p322 = pneg %p174
        %p323 = pneg %p171
        %p324 = pneg %p202
        %p325 = pneg %p199
        %s326 = sand.u32 %s189, 1
        %s327 = scalar_lea.sflag [#allocation5], %s326
        %s328 = sand.u32 %s189, 1
        %s329 = smul.addr %s328, 16
        %s330 = scalar_lea.vmem [#allocation8], %s329
        %v331 = vld [vmem:[%s288] sm:$0xff]
        %v332 = vld [vmem:[%s288 + $0x8] sm:$0xff]
        %v333 = vld [vmem:[%s297] sm:$0xff]
        %v334 = vld [vmem:[%s297 + $0x8] sm:$0xff]
        %v335 = vadd.f32 %v331, %v333
        %v336 = vadd.f32 %v332, %v334
        %v337 = vld [vmem:[%s2] sm:$0xff]
        %v338 = vld [vmem:[%s3] sm:$0xff]
        %340 = vset.pattern.permute.xlu0 0
        %341 = vperm.xlu0 %340, %v338
        %v342 = vpop.permute.xlu0 %341
        %vm344 = vcmask 130048
        %v346 = vsel %vm344, %v337, 0
        %348 = vmatprep.subr.mxu0 0.0
        %349 = vmatpush1.msra.mxu0 %v335
        %350 = vmatprep.subr.mxu0 0.0
        %351 = vmatpush1.msra.mxu0 %v336
        %352 = vmatprep.subr.mxu0 0.0
        %353 = vmatpush1.msra.mxu0 0.0
        %354 = vmatprep.subr.mxu0 0.0
        %355 = vmatpush1.msra.mxu0 0.0
        %356 = vmatprep.subr.mxu0 0.0
        %357 = vmatpush1.msra.mxu0 0.0
        %358 = vmatprep.subr.mxu0 0.0
        %359 = vmatpush1.msra.mxu0 0.0
        %360 = vmatprep.subr.mxu0 0.0
        %361 = vmatpush1.msra.mxu0 0.0
        %362 = vmatprep.subr.mxu0 0.0
        %363 = vmatpush1.msra.mxu0 0.0
        %364 = vmatprep.subr.mxu0 0.0
        %365 = vmatpush1.msra.mxu0 0.0
        %366 = vmatprep.subr.mxu0 0.0
        %367 = vmatpush1.msra.mxu0 0.0
        %368 = vmatprep.subr.mxu0 0.0
        %369 = vmatpush1.msra.mxu0 0.0
        %370 = vmatprep.subr.mxu0 0.0
        %371 = vmatpush1.msra.mxu0 0.0
        %372 = vmatprep.subr.mxu0 0.0
        %373 = vmatpush1.msra.mxu0 0.0
        %374 = vmatprep.subr.mxu0 0.0
        %375 = vmatpush1.msra.mxu0 0.0
        %376 = vmatprep.subr.mxu0 0.0
        %377 = vmatpush1.msra.mxu0 0.0
        %378 = vmatprep.subr.mxu0 0.0
        %379 = vmatpush1.msra.mxu0 0.0
        %380 = vmatprep.subr.mxu0 0.0
        %381 = vmatpush1.msra.mxu0 0.0
        %382 = vmatprep.subr.mxu0 0.0
        %383 = vmatpush1.msra.mxu0 0.0
        %384 = vmatprep.subr.mxu0 0.0
        %385 = vmatpush1.msra.mxu0 0.0
        %386 = vmatprep.subr.mxu0 0.0
        %387 = vmatpush1.msra.mxu0 0.0
        %388 = vmatprep.subr.mxu0 0.0
        %389 = vmatpush1.msra.mxu0 0.0
        %390 = vmatprep.subr.mxu0 0.0
        %391 = vmatpush1.msra.mxu0 0.0
        %392 = vmatprep.subr.mxu0 0.0
        %393 = vmatpush1.msra.mxu0 0.0
        %394 = vmatprep.subr.mxu0 0.0
        %395 = vmatpush1.msra.mxu0 0.0
        %396 = vmatprep.subr.mxu0 0.0
        %397 = vmatpush1.msra.mxu0 0.0
        %398 = vmatprep.subr.mxu0 0.0
        %399 = vmatpush1.msra.mxu0 0.0
        %400 = vmatprep.subr.mxu0 0.0
        %401 = vmatpush1.msra.mxu0 0.0
        %402 = vmatprep.subr.mxu0 0.0
        %403 = vmatpush1.msra.mxu0 0.0
        %404 = vmatprep.subr.mxu0 0.0
        %405 = vmatpush1.msra.mxu0 0.0
        %406 = vmatprep.subr.mxu0 0.0
        %407 = vmatpush1.msra.mxu0 0.0
        %408 = vmatprep.subr.mxu0 0.0
        %409 = vmatpush1.msra.mxu0 0.0
        %410 = vmatprep.subr.mxu0 0.0
        %411 = vmatpush1.msra.mxu0 0.0
        %412 = vmatprep.mubr.f32.mxu0 0.0
        %413 = vmatmul.mubr.f32.gmra.mrb[0].mxu0 %v346
        %v414 = vpop.f32.mrb[0].mxu0
        %v415 = vadd.f32 %v342, %v414
        %v416 = vpop.f32.mrb[0].mxu0
        %417 = vdwg.mxu0
        %v418 = vmax.f32 %v415, 0.0
        %v419 = vld [vmem:[%s4] sm:$0x1]
        %s420 = sld [smem:[#allocation2]]
        %v421 = vstv %s420
        %vm422 = vcmask 64512
        %v424 = vsel %vm422, %v419, 0
        %426 = vmatprep.subr.mxu0 0.0
        %427 = vmatpush1.msra.mxu0 %v418
        %428 = vmatprep.subr.mxu0 0.0
        %429 = vmatpush1.msra.mxu0 0.0
        %430 = vmatprep.subr.mxu0 0.0
        %431 = vmatpush1.msra.mxu0 0.0
        %432 = vmatprep.subr.mxu0 0.0
        %433 = vmatpush1.msra.mxu0 0.0
        %434 = vmatprep.subr.mxu0 0.0
        %435 = vmatpush1.msra.mxu0 0.0
        %436 = vmatprep.subr.mxu0 0.0
        %437 = vmatpush1.msra.mxu0 0.0
        %438 = vmatprep.subr.mxu0 0.0
        %439 = vmatpush1.msra.mxu0 0.0
        %440 = vmatprep.subr.mxu0 0.0
        %441 = vmatpush1.msra.mxu0 0.0
        %442 = vmatprep.subr.mxu0 0.0
        %443 = vmatpush1.msra.mxu0 0.0
        %444 = vmatprep.subr.mxu0 0.0
        %445 = vmatpush1.msra.mxu0 0.0
        %446 = vmatprep.subr.mxu0 0.0
        %447 = vmatpush1.msra.mxu0 0.0
        %448 = vmatprep.subr.mxu0 0.0
        %449 = vmatpush1.msra.mxu0 0.0
        %450 = vmatprep.subr.mxu0 0.0
        %451 = vmatpush1.msra.mxu0 0.0
        %452 = vmatprep.subr.mxu0 0.0
        %453 = vmatpush1.msra.mxu0 0.0
        %454 = vmatprep.subr.mxu0 0.0
        %455 = vmatpush1.msra.mxu0 0.0
        %456 = vmatprep.subr.mxu0 0.0
        %457 = vmatpush1.msra.mxu0 0.0
        %458 = vmatprep.subr.mxu0 0.0
        %459 = vmatpush1.msra.mxu0 0.0
        %460 = vmatprep.subr.mxu0 0.0
        %461 = vmatpush1.msra.mxu0 0.0
        %462 = vmatprep.subr.mxu0 0.0
        %463 = vmatpush1.msra.mxu0 0.0
        %464 = vmatprep.subr.mxu0 0.0
        %465 = vmatpush1.msra.mxu0 0.0
        %466 = vmatprep.subr.mxu0 0.0
        %467 = vmatpush1.msra.mxu0 0.0
        %468 = vmatprep.subr.mxu0 0.0
        %469 = vmatpush1.msra.mxu0 0.0
        %470 = vmatprep.subr.mxu0 0.0
        %471 = vmatpush1.msra.mxu0 0.0
        %472 = vmatprep.subr.mxu0 0.0
        %473 = vmatpush1.msra.mxu0 0.0
        %474 = vmatprep.subr.mxu0 0.0
        %475 = vmatpush1.msra.mxu0 0.0
        %476 = vmatprep.subr.mxu0 0.0
        %477 = vmatpush1.msra.mxu0 0.0
        %478 = vmatprep.subr.mxu0 0.0
        %479 = vmatpush1.msra.mxu0 0.0
        %480 = vmatprep.subr.mxu0 0.0
        %481 = vmatpush1.msra.mxu0 0.0
        %482 = vmatprep.subr.mxu0 0.0
        %483 = vmatpush1.msra.mxu0 0.0
        %484 = vmatprep.subr.mxu0 0.0
        %485 = vmatpush1.msra.mxu0 0.0
        %486 = vmatprep.subr.mxu0 0.0
        %487 = vmatpush1.msra.mxu0 0.0
        %488 = vmatprep.subr.mxu0 0.0
        %489 = vmatpush1.msra.mxu0 0.0
        %490 = vmatprep.mubr.f32.mxu0 0.0
        %491 = vmatmul.mubr.f32.gmra.mrb[0].mxu0 %v424
        %v492 = vpop.f32.mrb[0].mxu0
        %v493 = vadd.f32 %v421, %v492
        %v494 = vpop.f32.mrb[0].mxu0
        %495 = vdwg.mxu0
        %v496 = vxor.u32 %v493, 2147483648
        %v497 = vmul.f32 %v496, 1.442695
        %v498 = vpow.pop %v497
        %v499 = vadd.f32 %v498, 1.0
        %v500 = vrcp.pop %v499
        %v501 = vmul.f32 1.0, %v500
        %v502 = vsub.f32 1.0, %v501
        %v503 = vlaneseq
        %v504 = vshrl.u32 %v503, 7
        %v505 = vsub.s32 0, %v504
        %v506 = vrot.slane %v501, %v505
        %v507 = vmul.f32 %v506, %v331
        %v508 = vmul.f32 %v506, %v332
        %v509 = vlaneseq
        %v510 = vshrl.u32 %v509, 7
        %v511 = vsub.s32 0, %v510
        %v512 = vrot.slane %v502, %v511
        %v513 = vmul.f32 %v512, %v333
        %v514 = vmul.f32 %v512, %v334
        %v515 = vadd.f32 %v507, %v513
        %v516 = vadd.f32 %v508, %v514
        %517 = vst [vmem:[%s330] sm:$0xff] %v515
        %518 = vst [vmem:[%s330 + $0x8] sm:$0xff] %v516
        %s519 = sand.u32 %s189, 1
        %s520 = scalar_lea.sflag [#allocation5], %s519
        %s521 = sand.u32 %s189, 1
        %s522 = smul.addr %s521, 16
        %s523 = scalar_lea.vmem [#allocation8], %s522
        // Predicated region
        $region53: #{tpu_custom_call.1} parent=43 // pred_check
          %p524 = pneg %p199
        $region54: #{tpu_custom_call.1} parent=43 // pred_check_branch
          %526 = sbr.rel (%p524) target = $region56
        $region55: #{tpu_custom_call.1} parent=43 // pred_region
          %s528 = ssub.s32 256, 256
          %529 = vsyncadd %s520, %s528
          %s530 = smul.addr %s31, 2
          %s531 = sadd.s32 %s32, %s530
          %s532 = smul.addr %s531, 128
          %s533 = scalar_lea.hbm %s6, %s532
          %s534 = sshll.u32 %s523, 4
          %s535 = int_to_ptr.vmem [resolvable:$true] %s534
          %540 = dma.vmem_to_hbm [thread:$0]  %s535, 256, %s533, %s520, 128, 128, 8
        $region56: #{tpu_custom_call.1} parent=43 // pred_fallthru
          _
      $region44: #{tpu_custom_call.1} parent=5 // pred_fallthru
        _
      %p541 = scmp.le.s32.totalorder 2, %s22
      // Predicated region
      $region57: #{tpu_custom_call.1} parent=5 // pred_check
        %p542 = pneg %p541
      $region58: #{tpu_custom_call.1} parent=5 // pred_check_branch
        %544 = sbr.rel (%p542) target = $region60
      $region59: #{tpu_custom_call.1} parent=5 // pred_region
        %s545 = ssub.s32 %s22, 2
        // Predicated region
        $region61: #{tpu_custom_call.1} parent=59 // pred_check
          %p546 = pneg %p205
        $region62: #{tpu_custom_call.1} parent=59 // pred_check_branch
          %548 = sbr.rel (%p546) target = $region64
        $region63: #{tpu_custom_call.1} parent=59 // pred_region
          %s549 = sand.u32 %s190, 1
          %s550 = scalar_lea.sflag [#allocation5], %s549
          %s551 = sand.u32 %s190, 1
          %s552 = smul.addr %s551, 16
          %s553 = scalar_lea.vmem [#allocation8], %s552
          %554 = dma.done %s550, 256
        $region64: #{tpu_custom_call.1} parent=59 // pred_fallthru
          _
      $region60: #{tpu_custom_call.1} parent=5 // pred_fallthru
        _
    $region6: #{tpu_custom_call.1} parent=1 // loop_footer
      %s26 = sadd.s32 1, %s22
    $region7: #{tpu_custom_call.1} parent=1 // loop_footer_branch
      %21 = sbr.rel target = $region3
    $region8: #{tpu_custom_call.1} parent=1 // loop_exit
      _
    %555 = vsyncpa [#allocation4], 1
    %s556 = scalar_lea.sflag [#allocation4], 1
    %557 = vsyncpa %s556, 1
    %558 = vsyncpa [#allocation7], 1
    %s559 = scalar_lea.sflag [#allocation7], 1
    %560 = vsyncpa %s559, 1
    %561 = vsyncpa [#allocation5], 1
    %s562 = scalar_lea.sflag [#allocation5], 1
    %563 = vsyncpa %s562, 1

</llo_original>
